<compile_context>
chip_gen: v6e
topology: v6e:2x2x1
jax: 0.10.0
libtpu: 0.0.40
codegen_flags: <defaults>
</compile_context>

<pallas_src>
import math
from functools import partial

import jax
import jax.numpy as jnp
from jax.experimental import pallas as pl
from jax.experimental.pallas import tpu as pltpu


def _round_up(x, m):
    return (x + m - 1) // m * m


def _vmem_capacity_bytes():
    """Physical VMEM of the current generation (conservative v7x fallback)."""
    try:
        return int(pltpu.get_tpu_info().vmem_capacity_bytes)
    except Exception:
        return 64 * 1024 * 1024


def _pick_tk(in_size, tk_max):
    """Largest 128-multiple divisor of in_size that is <= tk_max.

    Never inflates the contraction width beyond 128-alignment (e.g. 2176 is
    tiled as 17 x 128 rather than being padded to 4096)."""
    if in_size <= tk_max:
        return in_size
    q = in_size // 128
    best = 1
    for d in range(1, q + 1):
        if q % d == 0 and d * 128 <= tk_max:
            best = d
    return best * 128


def _single_buffered_spec(block_shape, index_map):
    """Constant-index block: request a single VMEM buffer (the default second
    buffer is never used). Falls back to a plain BlockSpec if pipeline_mode is
    not available in the running JAX version."""
    try:
        return pl.BlockSpec(block_shape, index_map, pipeline_mode=pl.Buffered(1))
    except Exception:
        return pl.BlockSpec(block_shape, index_map)


def _lora_kernel_single_k(x_ref, a_ref, b_ref, o_ref):
    """Whole contraction fits in one block: no scratch accumulator needed."""
    xa = jnp.dot(x_ref[...], a_ref[...], preferred_element_type=jnp.float32)
    o_ref[...] = jnp.dot(
        xa.astype(b_ref.dtype), b_ref[...], preferred_element_type=jnp.float32
    ).astype(o_ref.dtype)


def _lora_kernel_multi_k(x_ref, a_ref, b_ref, o_ref, acc_ref, *, tk, num_k,
                         a_resident):
    """Grid = (M tiles, K tiles); K is the reduction (last, "arbitrary")."""
    k = pl.program_id(1)

    @pl.when(k == 0)
    def _():
        acc_ref[...] = jnp.zeros_like(acc_ref)

    if a_resident:
        # A is fully VMEM-resident; slice the current K tile out of it.
        start = pl.multiple_of(k * tk, tk)
        a_tile = a_ref[pl.ds(start, tk), :]
    else:
        a_tile = a_ref[...]

    # First matmul: accumulate [TM, TK] x [TK, rank_pad] into the f32 scratch.
    acc_ref[...] += jnp.dot(x_ref[...], a_tile,
                            preferred_element_type=jnp.float32)

    @pl.when(k == num_k - 1)
    def _():
        # Second matmul against the VMEM-resident (alpha-scaled) B and store a
        # lane-dense [TM, out_cols] tile.
        o_ref[...] = jnp.dot(
            acc_ref[...].astype(b_ref.dtype), b_ref[...],
            preferred_element_type=jnp.float32,
        ).astype(o_ref.dtype)


def lora_forward(x, A, B, alpha, *, tm=None, tk_max=None):
    """Computes alpha * (x @ A @ B), matching PyTorch LoRALayer.forward."""
    orig_shape = x.shape
    in_dim = orig_shape[-1]
    rank = A.shape[1]
    out_dim = B.shape[1]
    dtype = x.dtype
    itemsize = jnp.dtype(dtype).itemsize
    sublane = {4: 8, 2: 16, 1: 32}.get(itemsize, 8)

    x2d = x.reshape(-1, in_dim)
    M = x2d.shape[0]

    in_aligned = in_dim % 128 == 0
    out_aligned = out_dim % 128 == 0
    in_size = in_dim if in_aligned else _round_up(in_dim, 128)
    out_cols = out_dim if out_aligned else _round_up(out_dim, 128)
    rank_pad = _round_up(rank, 128)

    # ---- per-generation VMEM budget & tile caps -----------------------------
    vmem_cap = _vmem_capacity_bytes()
    big_vmem = vmem_cap >= 96 * 1024 * 1024          # v5e / v6e (128 MiB)
    vmem_limit = min(vmem_cap * 3 // 4, 100 * 1024 * 1024)   # ~48 MiB on v7x
    budget = int(vmem_limit * 0.85)
    if tk_max is None:
        tk_max = 4096 if big_vmem else 2048
    if tm is None:
        tm = 1024 if big_vmem else 512

    TK = _pick_tk(in_size, tk_max)
    num_k = in_size // TK

    a_bytes = in_size * rank_pad * itemsize
    a_resident = (num_k == 1) or (a_bytes <= min(16 * 1024 * 1024, budget // 4))

    def vmem_est(tm_):
        x_bufs = 2 * tm_ * TK * itemsize                       # double-buffered
        o_bufs = 2 * tm_ * out_cols * itemsize                 # double-buffered
        a_buf = a_bytes if a_resident else 2 * TK * rank_pad * itemsize
        b_buf = rank_pad * out_cols * itemsize                 # single-buffered
        acc = tm_ * rank_pad * 4 if num_k > 1 else 0
        return x_bufs + o_bufs + a_buf + b_buf + acc

    TM = max(sublane, min(_round_up(tm, sublane), _round_up(M, sublane)))
    while TM > sublane and vmem_est(TM) > budget:
        TM = max(sublane, _round_up(TM // 2, sublane))
    # Ensure num_m >= 2 so the "parallel" M axis feeds both v7x TensorCores.
    while TM > sublane and pl.cdiv(M, TM) < 2:
        TM = max(sublane, _round_up(TM // 2, sublane))
    num_m = pl.cdiv(M, TM)

    # ---- operands: pad only what is tiny or unavoidable ---------------------
    if in_aligned:
        x_in = x2d                                   # no host-side copy of x
    else:
        x_in = jnp.zeros((M, in_size), dtype).at[:, :in_dim].set(x2d)

    # A / B are tiny (rank rows/cols); alpha is folded into B (data, not shape).
    A_p = jnp.zeros((in_size, rank_pad), dtype).at[:in_dim, :rank].set(
        A.astype(dtype))
    B_scaled = (B.astype(jnp.float32) * jnp.float32(alpha)).astype(dtype)
    B_p = jnp.zeros((rank_pad, out_cols), dtype).at[:rank, :out_dim].set(B_scaled)

    # ---- grid / specs --------------------------------------------------------
    if num_k == 1:
        grid = (num_m,)
        kernel = _lora_kernel_single_k
        in_specs = [
            pl.BlockSpec((TM, TK), lambda i: (i, 0)),
            _single_buffered_spec((in_size, rank_pad), lambda i: (0, 0)),
            _single_buffered_spec((rank_pad, out_cols), lambda i: (0, 0)),
        ]
        out_specs = pl.BlockSpec((TM, out_cols), lambda i: (i, 0))
        scratch_shapes = []
        dim_sem = ("parallel",)
    else:
        grid = (num_m, num_k)
        kernel = partial(_lora_kernel_multi_k, tk=TK, num_k=num_k,
                         a_resident=a_resident)
        if a_resident:
            a_spec = _single_buffered_spec((in_size, rank_pad),
                                           lambda i, k: (0, 0))
        else:
            a_spec = pl.BlockSpec((TK, rank_pad), lambda i, k: (k, 0))
        in_specs = [
            pl.BlockSpec((TM, TK), lambda i, k: (i, k)),
            a_spec,
            _single_buffered_spec((rank_pad, out_cols), lambda i, k: (0, 0)),
        ]
        out_specs = pl.BlockSpec((TM, out_cols), lambda i, k: (i, 0))
        scratch_shapes = [pltpu.VMEM((TM, rank_pad), jnp.float32)]
        dim_sem = ("parallel", "arbitrary")

    # Cost estimate from the true (unpadded) dims.
    flops = 2 * M * in_dim * rank + 2 * M * rank * out_dim
    bytes_accessed = (M * in_dim + in_dim * rank + rank * out_dim
                      + M * out_dim) * itemsize

    out = pl.pallas_call(
        kernel,
        out_shape=jax.ShapeDtypeStruct((M, out_cols), dtype),
        grid_spec=pltpu.PrefetchScalarGridSpec(
            num_scalar_prefetch=0,
            grid=grid,
            in_specs=in_specs,
            out_specs=out_specs,
            scratch_shapes=scratch_shapes,
        ),
        compiler_params=pltpu.CompilerParams(
            dimension_semantics=dim_sem,
            vmem_limit_bytes=vmem_limit,
        ),
        cost_estimate=pl.CostEstimate(
            flops=flops, transcendentals=0, bytes_accessed=bytes_accessed),
    )(x_in, A_p, B_p)

    if not out_aligned:
        out = out[:, :out_dim]
    return out.reshape(*orig_shape[:-1], out_dim)


def init_lora_params(key, in_dim, out_dim, rank, dtype=jnp.float32):
    """Deterministic init matching the PyTorch module's __init__.

    A: kaiming_uniform_(a=sqrt(5)) on (in_dim, rank); for 2-D tensors PyTorch
       uses fan_in = size(1) = rank, so bound = sqrt(1 / rank).
    B: zeros(rank, out_dim).
    """
    bound = math.sqrt(1.0 / rank)
    A = jax.random.uniform(key, (in_dim, rank), dtype=dtype,
                           minval=-bound, maxval=bound)
    B = jnp.zeros((rank, out_dim), dtype=dtype)
    return A, B


if __name__ == "__main__":
    key = jax.random.PRNGKey(0)
    k_x, k_a, k_b, k_x2, k_a2, k_b2 = jax.random.split(key, 6)

    # 1) Module-faithful shapes & init (unaligned dims -> pad/slice fallback).
    batch, seq, in_dim, out_dim, rank, alpha = 2, 8, 32, 32, 4, 16.0
    x = jax.random.normal(k_x, (batch, seq, in_dim), dtype=jnp.float32)
    A, B = init_lora_params(k_a, in_dim, out_dim, rank)
    y0 = jax.block_until_ready(lora_forward(x, A, B, alpha))
    assert y0.shape == (batch, seq, out_dim)
    assert jnp.allclose(y0, 0.0)                      # B == 0 -> output is 0

    B_rand = jax.random.normal(k_b, (rank, out_dim), dtype=jnp.float32)
    y = jax.block_until_ready(lora_forward(x, A, B_rand, alpha))
    y_ref = alpha * jnp.einsum("bsi,ir,ro->bso", x, A, B_rand,
                               precision=jax.lax.Precision.HIGHEST)
    assert jnp.allclose(y, y_ref, atol=1e-2, rtol=1e-2)

    # 2) 128-aligned dims -> fast path: x passed through, no pad/slice copies.
    in_dim2, out_dim2, rank2 = 128, 256, 4
    x2 = jax.random.normal(k_x2, (batch, seq, in_dim2), dtype=jnp.float32)
    A2 = jax.random.uniform(k_a2, (in_dim2, rank2), dtype=jnp.float32,
                            minval=-0.5, maxval=0.5)
    B2 = jax.random.normal(k_b2, (rank2, out_dim2), dtype=jnp.float32)
    y2 = jax.block_until_ready(lora_forward(x2, A2, B2, alpha))
    y2_ref = alpha * jnp.einsum("bsi,ir,ro->bso", x2, A2, B2,
                                precision=jax.lax.Precision.HIGHEST)
    assert y2.shape == (batch, seq, out_dim2)
    assert jnp.allclose(y2, y2_ref, atol=1e-2, rtol=1e-2)

    # 3) bf16 inputs (recommended for this HBM-bound kernel), f32 accumulation.
    xb, Ab, Bb = (v.astype(jnp.bfloat16) for v in (x2, A2, B2))
    yb = jax.block_until_ready(lora_forward(xb, Ab, Bb, alpha))
    yb_ref = alpha * jnp.einsum(
        "bsi,ir,ro->bso", xb.astype(jnp.float32), Ab.astype(jnp.float32),
        Bb.astype(jnp.float32), precision=jax.lax.Precision.HIGHEST)
    assert yb.dtype == jnp.bfloat16
    assert jnp.allclose(yb.astype(jnp.float32), yb_ref, atol=1.5, rtol=5e-2)

    # 4) Multi-K-tile accumulation path with VMEM-resident A (tk_max override).
    in_dim3, out_dim3, rank3 = 256, 128, 8
    x3 = jax.random.normal(k_x, (batch, seq, in_dim3), dtype=jnp.float32)
    A3 = jax.random.uniform(k_a, (in_dim3, rank3), dtype=jnp.float32,
                            minval=-0.35, maxval=0.35)
    B3 = jax.random.normal(k_b, (rank3, out_dim3), dtype=jnp.float32)
    y3 = jax.block_until_ready(lora_forward(x3, A3, B3, alpha, tk_max=128))
    y3_ref = alpha * jnp.einsum("bsi,ir,ro->bso", x3, A3, B3,
                                precision=jax.lax.Precision.HIGHEST)
    assert jnp.allclose(y3, y3_ref, atol=1e-2, rtol=1e-2)

    print("KERNEL_OK")
</pallas_src>

<mosaic_0001>
module attributes {stable_mosaic.version = 11 : i64} {
  func.func @_lora_kernel_single_k(%arg0: i32, %arg1: memref<8x128xf32, #tpu.memory_space<vmem>>, %arg2: memref<128x128xf32, #tpu.memory_space<vmem>>, %arg3: memref<128x128xf32, #tpu.memory_space<vmem>>, %arg4: memref<8x128xf32, #tpu.memory_space<vmem>>) attributes {dimension_semantics = [#tpu.dimension_semantics<parallel>], iteration_bounds = array<i64: 2>, scalar_prefetch = 0 : i64, scratch_operands = 0 : i64, tpu.core_type = #tpu.core_type<tc>, window_params = [{transform_indices = @transform_0, window_bounds = array<i64: 8, 128>}, {pipeline_mode = #tpu.pipeline_mode<synchronous>, transform_indices = @transform_1, window_bounds = array<i64: 128, 128>}, {pipeline_mode = #tpu.pipeline_mode<synchronous>, transform_indices = @transform_2, window_bounds = array<i64: 128, 128>}, {transform_indices = @transform_3, window_bounds = array<i64: 8, 128>}]} {
    %c0 = arith.constant 0 : index
    %c0_0 = arith.constant 0 : index
    %0 = vector.load %arg1[%c0, %c0_0] : memref<8x128xf32, #tpu.memory_space<vmem>>, vector<8x128xf32>
    %c0_1 = arith.constant 0 : index
    %c0_2 = arith.constant 0 : index
    %1 = vector.load %arg2[%c0_1, %c0_2] : memref<128x128xf32, #tpu.memory_space<vmem>>, vector<128x128xf32>
    %cst = arith.constant dense<0.000000e+00> : vector<8x128xf32>
    %2 = tpu.matmul %0, %1, %cst {dimension_numbers = #tpu.dot_dimension_numbers<[1], [0], [0], [1], [0, 0, 1, 1], [], []>} : vector<8x128xf32>, vector<128x128xf32>, vector<8x128xf32> -> vector<8x128xf32>
    %c0_3 = arith.constant 0 : index
    %c0_4 = arith.constant 0 : index
    %3 = vector.load %arg3[%c0_3, %c0_4] : memref<128x128xf32, #tpu.memory_space<vmem>>, vector<128x128xf32>
    %cst_5 = arith.constant dense<0.000000e+00> : vector<8x128xf32>
    %4 = tpu.matmul %2, %3, %cst_5 {dimension_numbers = #tpu.dot_dimension_numbers<[1], [0], [0], [1], [0, 0, 1, 1], [], []>} : vector<8x128xf32>, vector<128x128xf32>, vector<8x128xf32> -> vector<8x128xf32>
    %c0_6 = arith.constant 0 : index
    %c0_7 = arith.constant 0 : index
    %5 = vector.load %arg4[%c0_6, %c0_7] : memref<8x128xf32, #tpu.memory_space<vmem>>, vector<8x128xf32>
    tpu.vector_store %arg4[%c0_6, %c0_7], %4 {strides = array<i32>} : memref<8x128xf32, #tpu.memory_space<vmem>>, vector<8x128xf32>,
    return
  }
  func.func @transform_0(%arg0: i32) -> (i32, i32) {
    %c0_i32 = arith.constant 0 : i32
    %c0_i32_0 = arith.constant 0 : i32
    return %arg0, %c0_i32 : i32, i32
  }
  func.func @transform_1(%arg0: i32) -> (i32, i32) {
    %c0_i32 = arith.constant 0 : i32
    %c0_i32_0 = arith.constant 0 : i32
    %c0_i32_1 = arith.constant 0 : i32
    return %c0_i32, %c0_i32_0 : i32, i32
  }
  func.func @transform_2(%arg0: i32) -> (i32, i32) {
    %c0_i32 = arith.constant 0 : i32
    %c0_i32_0 = arith.constant 0 : i32
    %c0_i32_1 = arith.constant 0 : i32
    return %c0_i32, %c0_i32_0 : i32, i32
  }
  func.func @transform_3(%arg0: i32) -> (i32, i32) {
    %c0_i32 = arith.constant 0 : i32
    %c0_i32_0 = arith.constant 0 : i32
    return %arg0, %c0_i32 : i32, i32
  }
}

</mosaic_0001>

<llo_original>
// kernel: tpu_custom_call.1
$region0: #{tpu_custom_call.1}
  #allocation0 [shape = 'u32[]', space=smem, size = 0x4, offset = 0x4, fixed_abs, tag = 'smem constant byte address 0x4 - core index']
  #allocation1 [shape = 'u32[144,128]{1,0:T(1,128)}', space=vmem, size = 0x12000, scoped, tag = 'internal scratch']
  %s0 = inlined_call_operand.hbm [shape: f32[16,128], index: 0, kind: input, shape index: {}]
  %s1 = inlined_call_operand.hbm [shape: f32[128,128], index: 1, kind: input, shape index: {}]
  %s2 = inlined_call_operand.hbm [shape: f32[128,128], index: 2, kind: input, shape index: {}]
  %s3 = inlined_call_operand.hbm [shape: f32[16,128], index: 3, kind: output, shape index: {}]
  %s4 = sld [smem:[#allocation0]]
  $region57: #{tpu_custom_call.1} parent=0
    _
  %s6 = ssub.s32 1, %s4
  %s7 = scalar_select 0, %s6, %s4
  $region1: #{tpu_custom_call.1} parent=0
    #allocation2 [shape = 'u8[8192]{0}', space=vmem, size = 0x2000, scoped, tag = 'input window, operand 0']
    #allocation3 [shape = 's32[2]{0}', space=sflag, size = 0x8, scoped, tag = 'scoped memory for tpu_custom_call.1']
    #allocation4 [shape = 's32[2]{0}', space=sflag, size = 0x8, scoped, tag = 'scoped memory for tpu_custom_call.1']
    #allocation5 [shape = 'u8[65536]{0}', space=vmem, size = 0x10000, scoped, tag = 'input window, operand 1, single buffered']
    #allocation6 [shape = 's32[1]{0}', space=sflag, size = 0x4, scoped, tag = 'scoped memory for tpu_custom_call.1']
    #allocation7 [shape = 'u8[65536]{0}', space=vmem, size = 0x10000, scoped, tag = 'input window, operand 2, single buffered']
    #allocation8 [shape = 'u8[8192]{0}', space=vmem, size = 0x2000, scoped, tag = 'output window, operand 0']
    %8 = vsyncpa [#allocation3], 0
    %s9 = scalar_lea.sflag [#allocation3], 1
    %10 = vsyncpa %s9, 0
    %11 = vsyncpa [#allocation6], 0
    %12 = vsyncpa [#allocation4], 0
    %s13 = scalar_lea.sflag [#allocation4], 1
    %14 = vsyncpa %s13, 0
    loop: start=0, step=1, limit=4
    $region2: #{tpu_custom_call.1} parent=1 // loop_pre_header
      _
    $region3: #{tpu_custom_call.1} parent=1 // loop_header
      %s16 = sphi 0, %s20
      %p17 = scmp.ge.s32.totalorder %s16, 4
      %s26 = sphi 0, %s28
      %s29 = sphi 0, %s26
      %s30 = sphi 0, %s29
      %s46 = sphi 0, %s30
      %s50 = sphi 0, %s50
      %s52 = sphi 0, %s50
      %s53 = sphi 0, %s52
      %s67 = sphi 0, %s53
      %s71 = sphi 0, %s71
      %s73 = sphi 0, %s71
      %s74 = sphi 0, %s73
      %s88 = sphi 0, %s74
      %s94 = sphi 0, %s96
      %s97 = sphi 0, %s94
      %s98 = sphi 0, %s97
      %s114 = sphi 0, %s98
    $region4: #{tpu_custom_call.1} parent=1 // loop_header_branch
      %19 = sbr.rel (%p17) target = $region8
    $region5: #{tpu_custom_call.1} parent=1 // loop_body
      %s21 = ssub.s32 %s16, 1
      %s22 = ssub.s32 %s16, 2
      %s23 = sadd.s32 %s16, 1
      %s24 = ssub.s32 %s16, %s23
      %p25 = scmp.eq.s32.totalorder %s24, 0
      %s27 = sadd.s32 %s26, 1
      %s28 = scalar_select %p25, %s26, %s27
      %p31 = pneg %p25
      %p32 = scmp.eq.s32.totalorder %s16, 1
      %p33 = por %p31, %p32
      %p34 = scmp.ne.s32.totalorder %s26, %s29
      %p35 = scmp.eq.s32.totalorder %s16, 0
      %p36 = por %p34, %p35
      %p37 = scmp.ne.s32.totalorder %s26, %s29
      %p38 = scmp.eq.s32.totalorder %s21, 1
      %p39 = por %p37, %p38
      %p40 = scmp.ne.s32.totalorder %s29, %s30
      %p41 = scmp.eq.s32.totalorder %s21, 0
      %p42 = por %p40, %p41
      %p43 = scmp.ne.s32.totalorder %s29, %s30
      %p44 = scmp.eq.s32.totalorder %s22, 1
      %p45 = por %p43, %p44
      %p47 = scmp.ne.s32.totalorder %s30, %s46
      %p48 = scmp.eq.s32.totalorder %s22, 0
      %p49 = por %p47, %p48
      %s51 = sadd.s32 %s50, 1
      %p54 = scmp.eq.s32.totalorder %s16, 1
      %p55 = scmp.ne.s32.totalorder %s50, %s52
      %p56 = scmp.eq.s32.totalorder %s16, 0
      %p57 = por %p55, %p56
      %p58 = scmp.ne.s32.totalorder %s50, %s52
      %p59 = scmp.eq.s32.totalorder %s21, 1
      %p60 = por %p58, %p59
      %p61 = scmp.ne.s32.totalorder %s52, %s53
      %p62 = scmp.eq.s32.totalorder %s21, 0
      %p63 = por %p61, %p62
      %p64 = scmp.ne.s32.totalorder %s52, %s53
      %p65 = scmp.eq.s32.totalorder %s22, 1
      %p66 = por %p64, %p65
      %p68 = scmp.ne.s32.totalorder %s53, %s67
      %p69 = scmp.eq.s32.totalorder %s22, 0
      %p70 = por %p68, %p69
      %s72 = sadd.s32 %s71, 1
      %p75 = scmp.eq.s32.totalorder %s16, 1
      %p76 = scmp.ne.s32.totalorder %s71, %s73
      %p77 = scmp.eq.s32.totalorder %s16, 0
      %p78 = por %p76, %p77
      %p79 = scmp.ne.s32.totalorder %s71, %s73
      %p80 = scmp.eq.s32.totalorder %s21, 1
      %p81 = por %p79, %p80
      %p82 = scmp.ne.s32.totalorder %s73, %s74
      %p83 = scmp.eq.s32.totalorder %s21, 0
      %p84 = por %p82, %p83
      %p85 = scmp.ne.s32.totalorder %s73, %s74
      %p86 = scmp.eq.s32.totalorder %s22, 1
      %p87 = por %p85, %p86
      %p89 = scmp.ne.s32.totalorder %s74, %s88
      %p90 = scmp.eq.s32.totalorder %s22, 0
      %p91 = por %p89, %p90
      %s92 = ssub.s32 %s16, %s23
      %p93 = scmp.eq.s32.totalorder %s92, 0
      %s95 = sadd.s32 %s94, 1
      %s96 = scalar_select %p93, %s94, %s95
      %p99 = pneg %p93
      %p100 = scmp.eq.s32.totalorder %s16, 1
      %p101 = por %p99, %p100
      %p102 = scmp.ne.s32.totalorder %s94, %s97
      %p103 = scmp.eq.s32.totalorder %s16, 0
      %p104 = por %p102, %p103
      %p105 = scmp.ne.s32.totalorder %s94, %s97
      %p106 = scmp.eq.s32.totalorder %s21, 1
      %p107 = por %p105, %p106
      %p108 = scmp.ne.s32.totalorder %s97, %s98
      %p109 = scmp.eq.s32.totalorder %s21, 0
      %p110 = por %p108, %p109
      %p111 = scmp.ne.s32.totalorder %s97, %s98
      %p112 = scmp.eq.s32.totalorder %s22, 1
      %p113 = por %p111, %p112
      %p115 = scmp.ne.s32.totalorder %s98, %s114
      %p116 = scmp.eq.s32.totalorder %s22, 0
      %p117 = por %p115, %p116
      %p118 = scmp.le.s32.totalorder 1, %s16
      %p119 = scmp.lt.s32.totalorder %s16, 3
      %p120 = pnand %p118, %p119
      %p121 = pneg %p120
      // Predicated region
      $region9: #{tpu_custom_call.1} parent=5 // pred_check
        _
      $region10: #{tpu_custom_call.1} parent=5 // pred_check_branch
        %123 = sbr.rel (%p120) target = $region12
      $region11: #{tpu_custom_call.1} parent=5 // pred_region
        %s124 = ssub.s32 %s16, 1
        // Predicated region
        $region13: #{tpu_custom_call.1} parent=11 // pred_check
          %p125 = pneg %p63
        $region14: #{tpu_custom_call.1} parent=11 // pred_check_branch
          %127 = sbr.rel (%p125) target = $region16
        $region15: #{tpu_custom_call.1} parent=11 // pred_region
          %s129 = ssub.s32 2048, 2048
          %130 = vsyncadd [#allocation6], %s129
          %s131 = sshll.u32 [#allocation5], 4
          %s132 = int_to_ptr.vmem [resolvable:$true] %s131
          %137 = dma.hbm_to_vmem [thread:$0]  %s1, 2048, %s132, [#allocation6], 128, 128, 8
        $region16: #{tpu_custom_call.1} parent=11 // pred_fallthru
          _
        // Predicated region
        $region17: #{tpu_custom_call.1} parent=11 // pred_check
          %p138 = pneg %p84
        $region18: #{tpu_custom_call.1} parent=11 // pred_check_branch
          %140 = sbr.rel (%p138) target = $region20
        $region19: #{tpu_custom_call.1} parent=11 // pred_region
          %s142 = ssub.s32 2048, 2048
          %143 = vsyncadd [#allocation6], %s142
          %s144 = sshll.u32 [#allocation7], 4
          %s145 = int_to_ptr.vmem [resolvable:$true] %s144
          %150 = dma.hbm_to_vmem [thread:$0]  %s2, 2048, %s145, [#allocation6], 128, 128, 8
        $region20: #{tpu_custom_call.1} parent=11 // pred_fallthru
          _
      $region12: #{tpu_custom_call.1} parent=5 // pred_fallthru
        _
      %p151 = scmp.lt.s32.totalorder %s16, 2
      // Predicated region
      $region21: #{tpu_custom_call.1} parent=5 // pred_check
        %p152 = pneg %p151
      $region22: #{tpu_custom_call.1} parent=5 // pred_check_branch
        %154 = sbr.rel (%p152) target = $region24
      $region23: #{tpu_custom_call.1} parent=5 // pred_region
        // Predicated region
        $region25: #{tpu_custom_call.1} parent=23 // pred_check
          %p155 = pneg %p36
        $region26: #{tpu_custom_call.1} parent=23 // pred_check_branch
          %157 = sbr.rel (%p155) target = $region28
        $region27: #{tpu_custom_call.1} parent=23 // pred_region
          %s158 = sand.u32 %s26, 1
          %s159 = scalar_lea.sflag [#allocation3], %s158
          %s160 = sand.u32 %s26, 1
          %s161 = smul.addr %s160, 8
          %s162 = scalar_lea.vmem [#allocation2], %s161
          %s164 = ssub.s32 128, 128
          %165 = vsyncadd %s159, %s164
          %s166 = smul.addr %s16, 128
          %s167 = scalar_lea.hbm %s0, %s166
          %s169 = sshll.u32 %s162, 4
          %s170 = int_to_ptr.vmem [resolvable:$true] %s169
          %172 = dma.hbm_to_vmem [thread:$0]  %s167, 128, %s170, %s159
        $region28: #{tpu_custom_call.1} parent=23 // pred_fallthru
          _
      $region24: #{tpu_custom_call.1} parent=5 // pred_fallthru
        _
      %p173 = scmp.le.s32.totalorder 1, %s16
      %p174 = scmp.lt.s32.totalorder %s16, 3
      %p175 = pnand %p173, %p174
      %p176 = pneg %p175
      // Predicated region
      $region29: #{tpu_custom_call.1} parent=5 // pred_check
        _
      $region30: #{tpu_custom_call.1} parent=5 // pred_check_branch
        %178 = sbr.rel (%p175) target = $region32
      $region31: #{tpu_custom_call.1} parent=5 // pred_region
        %s179 = ssub.s32 %s16, 1
        %s180 = sand.u32 %s29, 1
        %s181 = scalar_lea.sflag [#allocation3], %s180
        %s182 = sand.u32 %s29, 1
        %s183 = smul.addr %s182, 8
        %s184 = scalar_lea.vmem [#allocation2], %s183
        // Predicated region
        $region33: #{tpu_custom_call.1} parent=31 // pred_check
          %p185 = pneg %p42
        $region34: #{tpu_custom_call.1} parent=31 // pred_check_branch
          %187 = sbr.rel (%p185) target = $region36
        $region35: #{tpu_custom_call.1} parent=31 // pred_region
          %188 = dma.done %s181, 128
        $region36: #{tpu_custom_call.1} parent=31 // pred_fallthru
          _
        // Predicated region
        $region37: #{tpu_custom_call.1} parent=31 // pred_check
          %p189 = pneg %p63
        $region38: #{tpu_custom_call.1} parent=31 // pred_check_branch
          %191 = sbr.rel (%p189) target = $region40
        $region39: #{tpu_custom_call.1} parent=31 // pred_region
          %192 = dma.done [#allocation6], 2048
        $region40: #{tpu_custom_call.1} parent=31 // pred_fallthru
          _
        // Predicated region
        $region41: #{tpu_custom_call.1} parent=31 // pred_check
          %p193 = pneg %p84
        $region42: #{tpu_custom_call.1} parent=31 // pred_check_branch
          %195 = sbr.rel (%p193) target = $region44
        $region43: #{tpu_custom_call.1} parent=31 // pred_region
          %196 = dma.done [#allocation6], 2048
        $region44: #{tpu_custom_call.1} parent=31 // pred_fallthru
          _
        %s197 = sand.u32 %s29, 1
        %s198 = scalar_lea.sflag [#allocation3], %s197
        %s199 = sand.u32 %s29, 1
        %s200 = smul.addr %s199, 8
        %s201 = scalar_lea.vmem [#allocation2], %s200
        %p202 = pneg %p42
        %p203 = pneg %p39
        %p204 = pneg %p63
        %p205 = pneg %p60
        %p206 = pneg %p84
        %p207 = pneg %p81
        %p208 = pneg %p110
        %p209 = pneg %p107
        %s210 = sand.u32 %s97, 1
        %s211 = scalar_lea.sflag [#allocation4], %s210
        %s212 = sand.u32 %s97, 1
        %s213 = smul.addr %s212, 8
        %s214 = scalar_lea.vmem [#allocation8], %s213
        %v215 = vld [vmem:[%s184] sm:$0xff]
        %v216 = vld [vmem:[#allocation5] sm:$0xff]
        %v217 = vld [vmem:[#allocation5 + $0x8] sm:$0xff]
        %v218 = vld [vmem:[#allocation5 + $0x10] sm:$0xff]
        %v219 = vld [vmem:[#allocation5 + $0x18] sm:$0xff]
        %v220 = vld [vmem:[#allocation5 + $0x20] sm:$0xff]
        %v221 = vld [vmem:[#allocation5 + $0x28] sm:$0xff]
        %v222 = vld [vmem:[#allocation5 + $0x30] sm:$0xff]
        %v223 = vld [vmem:[#allocation5 + $0x38] sm:$0xff]
        %v224 = vld [vmem:[#allocation5 + $0x40] sm:$0xff]
        %v225 = vld [vmem:[#allocation5 + $0x48] sm:$0xff]
        %v226 = vld [vmem:[#allocation5 + $0x50] sm:$0xff]
        %v227 = vld [vmem:[#allocation5 + $0x58] sm:$0xff]
        %v228 = vld [vmem:[#allocation5 + $0x60] sm:$0xff]
        %v229 = vld [vmem:[#allocation5 + $0x68] sm:$0xff]
        %v230 = vld [vmem:[#allocation5 + $0x70] sm:$0xff]
        %v231 = vld [vmem:[#allocation5 + $0x78] sm:$0xff]
        %232 = vmatprep.subr.mxu0 0.0
        %233 = vmatpush1.msra.mxu0 %v231
        %234 = vmatprep.subr.mxu0 0.0
        %235 = vmatpush1.msra.mxu0 %v230
        %236 = vmatprep.subr.mxu0 0.0
        %237 = vmatpush1.msra.mxu0 %v229
        %238 = vmatprep.subr.mxu0 0.0
        %239 = vmatpush1.msra.mxu0 %v228
        %240 = vmatprep.subr.mxu0 0.0
        %241 = vmatpush1.msra.mxu0 %v227
        %242 = vmatprep.subr.mxu0 0.0
        %243 = vmatpush1.msra.mxu0 %v226
        %244 = vmatprep.subr.mxu0 0.0
        %245 = vmatpush1.msra.mxu0 %v225
        %246 = vmatprep.subr.mxu0 0.0
        %247 = vmatpush1.msra.mxu0 %v224
        %248 = vmatprep.subr.mxu0 0.0
        %249 = vmatpush1.msra.mxu0 %v223
        %250 = vmatprep.subr.mxu0 0.0
        %251 = vmatpush1.msra.mxu0 %v222
        %252 = vmatprep.subr.mxu0 0.0
        %253 = vmatpush1.msra.mxu0 %v221
        %254 = vmatprep.subr.mxu0 0.0
        %255 = vmatpush1.msra.mxu0 %v220
        %256 = vmatprep.subr.mxu0 0.0
        %257 = vmatpush1.msra.mxu0 %v219
        %258 = vmatprep.subr.mxu0 0.0
        %259 = vmatpush1.msra.mxu0 %v218
        %260 = vmatprep.subr.mxu0 0.0
        %261 = vmatpush1.msra.mxu0 %v217
        %262 = vmatprep.subr.mxu0 0.0
        %263 = vmatpush1.msra.mxu0 %v216
        %264 = vmatprep.subr.mxu0 0.0
        %265 = vmatpush2.msra.mxu0 0.0
        %266 = vmatprep.subr.mxu0 0.0
        %267 = vmatpush2.msra.mxu0 0.0
        %268 = vmatprep.subr.mxu0 0.0
        %269 = vmatpush2.msra.mxu0 0.0
        %270 = vmatprep.subr.mxu0 0.0
        %271 = vmatpush2.msra.mxu0 0.0
        %272 = vmatprep.subr.mxu0 0.0
        %273 = vmatpush2.msra.mxu0 0.0
        %274 = vmatprep.subr.mxu0 0.0
        %275 = vmatpush2.msra.mxu0 0.0
        %276 = vmatprep.subr.mxu0 0.0
        %277 = vmatpush2.msra.mxu0 0.0
        %278 = vmatprep.subr.mxu0 0.0
        %279 = vmatpush2.msra.mxu0 0.0
        %280 = vmatprep.subr.mxu0 0.0
        %281 = vmatpush2.msra.mxu0 0.0
        %282 = vmatprep.subr.mxu0 0.0
        %283 = vmatpush2.msra.mxu0 0.0
        %284 = vmatprep.subr.mxu0 0.0
        %285 = vmatpush2.msra.mxu0 0.0
        %286 = vmatprep.subr.mxu0 0.0
        %287 = vmatpush2.msra.mxu0 0.0
        %288 = vmatprep.subr.mxu0 0.0
        %289 = vmatpush2.msra.mxu0 0.0
        %290 = vmatprep.subr.mxu0 0.0
        %291 = vmatpush2.msra.mxu0 0.0
        %292 = vmatprep.subr.mxu0 0.0
        %293 = vmatpush2.msra.mxu0 0.0
        %294 = vmatprep.subr.mxu0 0.0
        %295 = vmatpush2.msra.mxu0 0.0
        %296 = vmatprep.mubr.f32.mxu0 0.0
        %297 = vmatmul.mubr.f32.gmra.mxu0 %v215
        %v298 = vpop.f32.mrf.mxu0
        %v299 = vadd.f32 0.0, %v298
        %v300 = vpop.f32.mrf.mxu0
        %301 = vdwg.mxu0
        %v302 = vld [vmem:[#allocation7] sm:$0xff]
        %v303 = vld [vmem:[#allocation7 + $0x8] sm:$0xff]
        %v304 = vld [vmem:[#allocation7 + $0x10] sm:$0xff]
        %v305 = vld [vmem:[#allocation7 + $0x18] sm:$0xff]
        %v306 = vld [vmem:[#allocation7 + $0x20] sm:$0xff]
        %v307 = vld [vmem:[#allocation7 + $0x28] sm:$0xff]
        %v308 = vld [vmem:[#allocation7 + $0x30] sm:$0xff]
        %v309 = vld [vmem:[#allocation7 + $0x38] sm:$0xff]
        %v310 = vld [vmem:[#allocation7 + $0x40] sm:$0xff]
        %v311 = vld [vmem:[#allocation7 + $0x48] sm:$0xff]
        %v312 = vld [vmem:[#allocation7 + $0x50] sm:$0xff]
        %v313 = vld [vmem:[#allocation7 + $0x58] sm:$0xff]
        %v314 = vld [vmem:[#allocation7 + $0x60] sm:$0xff]
        %v315 = vld [vmem:[#allocation7 + $0x68] sm:$0xff]
        %v316 = vld [vmem:[#allocation7 + $0x70] sm:$0xff]
        %v317 = vld [vmem:[#allocation7 + $0x78] sm:$0xff]
        %318 = vmatprep.subr.mxu0 0.0
        %319 = vmatpush1.msra.mxu0 %v317
        %320 = vmatprep.subr.mxu0 0.0
        %321 = vmatpush1.msra.mxu0 %v316
        %322 = vmatprep.subr.mxu0 0.0
        %323 = vmatpush1.msra.mxu0 %v315
        %324 = vmatprep.subr.mxu0 0.0
        %325 = vmatpush1.msra.mxu0 %v314
        %326 = vmatprep.subr.mxu0 0.0
        %327 = vmatpush1.msra.mxu0 %v313
        %328 = vmatprep.subr.mxu0 0.0
        %329 = vmatpush1.msra.mxu0 %v312
        %330 = vmatprep.subr.mxu0 0.0
        %331 = vmatpush1.msra.mxu0 %v311
        %332 = vmatprep.subr.mxu0 0.0
        %333 = vmatpush1.msra.mxu0 %v310
        %334 = vmatprep.subr.mxu0 0.0
        %335 = vmatpush1.msra.mxu0 %v309
        %336 = vmatprep.subr.mxu0 0.0
        %337 = vmatpush1.msra.mxu0 %v308
        %338 = vmatprep.subr.mxu0 0.0
        %339 = vmatpush1.msra.mxu0 %v307
        %340 = vmatprep.subr.mxu0 0.0
        %341 = vmatpush1.msra.mxu0 %v306
        %342 = vmatprep.subr.mxu0 0.0
        %343 = vmatpush1.msra.mxu0 %v305
        %344 = vmatprep.subr.mxu0 0.0
        %345 = vmatpush1.msra.mxu0 %v304
        %346 = vmatprep.subr.mxu0 0.0
        %347 = vmatpush1.msra.mxu0 %v303
        %348 = vmatprep.subr.mxu0 0.0
        %349 = vmatpush1.msra.mxu0 %v302
        %350 = vmatprep.subr.mxu0 0.0
        %351 = vmatpush2.msra.mxu0 0.0
        %352 = vmatprep.subr.mxu0 0.0
        %353 = vmatpush2.msra.mxu0 0.0
        %354 = vmatprep.subr.mxu0 0.0
        %355 = vmatpush2.msra.mxu0 0.0
        %356 = vmatprep.subr.mxu0 0.0
        %357 = vmatpush2.msra.mxu0 0.0
        %358 = vmatprep.subr.mxu0 0.0
        %359 = vmatpush2.msra.mxu0 0.0
        %360 = vmatprep.subr.mxu0 0.0
        %361 = vmatpush2.msra.mxu0 0.0
        %362 = vmatprep.subr.mxu0 0.0
        %363 = vmatpush2.msra.mxu0 0.0
        %364 = vmatprep.subr.mxu0 0.0
        %365 = vmatpush2.msra.mxu0 0.0
        %366 = vmatprep.subr.mxu0 0.0
        %367 = vmatpush2.msra.mxu0 0.0
        %368 = vmatprep.subr.mxu0 0.0
        %369 = vmatpush2.msra.mxu0 0.0
        %370 = vmatprep.subr.mxu0 0.0
        %371 = vmatpush2.msra.mxu0 0.0
        %372 = vmatprep.subr.mxu0 0.0
        %373 = vmatpush2.msra.mxu0 0.0
        %374 = vmatprep.subr.mxu0 0.0
        %375 = vmatpush2.msra.mxu0 0.0
        %376 = vmatprep.subr.mxu0 0.0
        %377 = vmatpush2.msra.mxu0 0.0
        %378 = vmatprep.subr.mxu0 0.0
        %379 = vmatpush2.msra.mxu0 0.0
        %380 = vmatprep.subr.mxu0 0.0
        %381 = vmatpush2.msra.mxu0 0.0
        %382 = vmatprep.mubr.f32.mxu0 0.0
        %383 = vmatmul.mubr.f32.gmra.mxu0 %v299
        %v384 = vpop.f32.mrf.mxu0
        %v385 = vadd.f32 0.0, %v384
        %v386 = vpop.f32.mrf.mxu0
        %387 = vdwg.mxu0
        %388 = vst [vmem:[%s214] sm:$0xff] %v385
        %s389 = sand.u32 %s97, 1
        %s390 = scalar_lea.sflag [#allocation4], %s389
        %s391 = sand.u32 %s97, 1
        %s392 = smul.addr %s391, 8
        %s393 = scalar_lea.vmem [#allocation8], %s392
        // Predicated region
        $region45: #{tpu_custom_call.1} parent=31 // pred_check
          %p394 = pneg %p107
        $region46: #{tpu_custom_call.1} parent=31 // pred_check_branch
          %396 = sbr.rel (%p394) target = $region48
        $region47: #{tpu_custom_call.1} parent=31 // pred_region
          %s398 = ssub.s32 128, 128
          %399 = vsyncadd %s390, %s398
          %s400 = smul.addr %s21, 128
          %s401 = scalar_lea.hbm %s3, %s400
          %s403 = sshll.u32 %s393, 4
          %s404 = int_to_ptr.vmem [resolvable:$true] %s403
          %406 = dma.vmem_to_hbm [thread:$0]  %s404, 128, %s401, %s390
        $region48: #{tpu_custom_call.1} parent=31 // pred_fallthru
          _
      $region32: #{tpu_custom_call.1} parent=5 // pred_fallthru
        _
      %p407 = scmp.le.s32.totalorder 2, %s16
      // Predicated region
      $region49: #{tpu_custom_call.1} parent=5 // pred_check
        %p408 = pneg %p407
      $region50: #{tpu_custom_call.1} parent=5 // pred_check_branch
        %410 = sbr.rel (%p408) target = $region52
      $region51: #{tpu_custom_call.1} parent=5 // pred_region
        %s411 = ssub.s32 %s16, 2
        // Predicated region
        $region53: #{tpu_custom_call.1} parent=51 // pred_check
          %p412 = pneg %p113
        $region54: #{tpu_custom_call.1} parent=51 // pred_check_branch
          %414 = sbr.rel (%p412) target = $region56
        $region55: #{tpu_custom_call.1} parent=51 // pred_region
          %s415 = sand.u32 %s98, 1
          %s416 = scalar_lea.sflag [#allocation4], %s415
          %s417 = sand.u32 %s98, 1
          %s418 = smul.addr %s417, 8
          %s419 = scalar_lea.vmem [#allocation8], %s418
          %420 = dma.done %s416, 128
        $region56: #{tpu_custom_call.1} parent=51 // pred_fallthru
          _
      $region52: #{tpu_custom_call.1} parent=5 // pred_fallthru
        _
    $region6: #{tpu_custom_call.1} parent=1 // loop_footer
      %s20 = sadd.s32 1, %s16
    $region7: #{tpu_custom_call.1} parent=1 // loop_footer_branch
      %15 = sbr.rel target = $region3
    $region8: #{tpu_custom_call.1} parent=1 // loop_exit
      _
    %421 = vsyncpa [#allocation3], 1
    %s422 = scalar_lea.sflag [#allocation3], 1
    %423 = vsyncpa %s422, 1
    %424 = vsyncpa [#allocation6], 1
    %425 = vsyncpa [#allocation4], 1
    %s426 = scalar_lea.sflag [#allocation4], 1
    %427 = vsyncpa %s426, 1

</llo_original>
